<compile_context>
chip_gen: v7x
topology: tpu7x:2x2x1
jax: 0.10.0
libtpu: 0.0.40
codegen_flags: <defaults>
</compile_context>

<pallas_src>
import math
from functools import partial

import jax
import jax.numpy as jnp
from jax import lax
from jax.experimental import pallas as pl
from jax.experimental.pallas import tpu as pltpu


_MASK_VALUE = -1e30   # large finite negative: avoids -inf - (-inf) = NaN pathologies


def _vmem_limit_bytes():
    """Generation-aware scoped-VMEM limit (~60% of physical VMEM)."""
    try:
        return int(pltpu.get_tpu_info().vmem_capacity_bytes * 0.6)
    except Exception:
        return 48 * 1024 * 1024        # safe fallback on v5e/v6e (128 MiB) and v7x (64 MiB)


def _has_bf16_transcendentals():
    """v6e/v7x have bf16 VPU/EUP; v5e and older do not."""
    try:
        kind = jax.devices()[0].device_kind.lower()
    except Exception:
        return False
    return not any(tag in kind for tag in ("v2", "v3", "v4", "v5"))


def _sublane_tile(n, maximum):
    """Largest multiple-of-8 tile <= maximum that divides n, else the full dim."""
    for t in (512, 256, 128, 64, 32, 16, 8):
        if t <= maximum and n % t == 0:
            return t
    return n   # legal (full-dim block); TODO(synk): pad odd/huge sizes to bound VMEM


def _lane_tile(n, maximum):
    """Largest multiple-of-128 tile <= maximum that divides n, else the full dim."""
    for t in (1024, 512, 256, 128):
        if t <= maximum and n % t == 0:
            return t
    return n


# ---------------------------------------------------------------------------
# Stage 1: fused QKV projection, tiled over (rows, output columns).
# ---------------------------------------------------------------------------
def qkv_proj_kernel(x_ref, w_ref, o_ref):
    # Single MXU pass per (row-tile, col-tile); f32 accumulation.
    # TODO(synk): add a K grid axis + f32 acc scratch for very large d_in.
    o_ref[...] = jnp.dot(x_ref[...], w_ref[...],
                         preferred_element_type=jnp.float32).astype(o_ref.dtype)


# ---------------------------------------------------------------------------
# Stage 2: flash attention (online softmax) + fused output projection.
# ---------------------------------------------------------------------------
def _make_flash_kernel(exp_dtype):
    def flash_attn_kernel(q_ref, k_ref, v_ref, wo_ref, bo_ref, o_ref,
                          m_sc, l_sc, acc_sc):
        qi = pl.program_id(1)
        ki = pl.program_id(2)
        nk = pl.num_programs(2)

        tq = q_ref.shape[2]
        tk = k_ref.shape[2]

        @pl.when(ki == 0)
        def _init():
            m_sc[...] = jnp.full_like(m_sc, -jnp.inf)
            l_sc[...] = jnp.zeros_like(l_sc)
            acc_sc[...] = jnp.zeros_like(acc_sc)

        def _update(masked):
            q = q_ref[0]                      # (H, tq, hd), compute dtype
            k = k_ref[0]                      # (H, tk, hd)
            v = v_ref[0]                      # (H, tk, hd)

            # Heads batched in one einsum; 1/sqrt(hd) already folded into W_query.
            s = jnp.einsum("hqd,hkd->hqk", q, k,
                           preferred_element_type=jnp.float32)   # (H, tq, tk) f32

            if masked:
                # Only diagonal tiles pay for the mask (iota + compare + select).
                q_pos = qi * tq + lax.broadcasted_iota(jnp.int32, (tq, tk), 0)
                k_pos = ki * tk + lax.broadcasted_iota(jnp.int32, (tq, tk), 1)
                s = jnp.where((k_pos <= q_pos)[None], s, _MASK_VALUE)

            m_prev = m_sc[...]
            m_new = jnp.maximum(m_prev, jnp.max(s, axis=-1, keepdims=True))
            alpha = jnp.exp(m_prev - m_new)                       # (H, tq, 1) f32
            # exp in bf16 on chips with a bf16 EUP (harmless cast when exp_dtype == f32).
            p = jnp.exp((s - m_new).astype(exp_dtype))            # (H, tq, tk)
            l_sc[...] = alpha * l_sc[...] + jnp.sum(p, axis=-1, keepdims=True,
                                                    dtype=jnp.float32)
            acc_sc[...] = alpha * acc_sc[...] + jnp.einsum(
                "hqk,hkd->hqd", p.astype(v.dtype), v,
                preferred_element_type=jnp.float32)
            m_sc[...] = m_new

        # Fully visible kv tiles: no mask work at all.
        @pl.when(ki < qi)
        def _full():
            _update(masked=False)

        # Diagonal tile: apply the causal mask.
        @pl.when(ki == qi)
        def _diag():
            _update(masked=True)
        # ki > qi: fully masked -> no compute; DMA also skipped via clamped index_map.

        @pl.when(ki == nk - 1)
        def _finalize():
            # Normalize once at the end; approx reciprocal runs on the (idle) EUP.
            ctx = acc_sc[...] * pl.reciprocal(l_sc[...], approx=True)  # (H, tq, hd) f32
            ctx = ctx.astype(wo_ref.dtype)
            # Head-concat fused into the output projection: one batched MXU contraction
            # over heads, then a head-sum (replaces the loop-carried per-head matmuls).
            partial_out = lax.dot_general(
                ctx, wo_ref[...],                                   # (H, hd, d_out)
                dimension_numbers=(((2,), (1,)), ((0,), (0,))),
                preferred_element_type=jnp.float32)                 # (H, tq, d_out)
            out = jnp.sum(partial_out, axis=0) + bo_ref[...]        # (tq, d_out) f32
            o_ref[0] = out.astype(o_ref.dtype)

    return flash_attn_kernel


# ---------------------------------------------------------------------------
# Wrapper
# ---------------------------------------------------------------------------
def multi_head_attention(x, wq, wk, wv, wo, bo, *, num_heads,
                         compute_dtype=jnp.bfloat16):
    """Forward pass of the PyTorch MultiHeadAttention module (eval mode)."""
    B, T, d_in = x.shape
    d_out = wq.shape[0]
    assert d_out % num_heads == 0, "d_out must be divisible by num_heads"
    head_dim = d_out // num_heads
    vmem_limit = _vmem_limit_bytes()

    # --- host/XLA-side prep (free relative to the kernels) ------------------
    scale = 1.0 / math.sqrt(head_dim)
    # Fuse Q/K/V weights, pre-transpose to (d_in, 3*d_out), fold softmax scale into Wq.
    wqkv_t = jnp.concatenate([wq * scale, wk, wv], axis=0).T.astype(compute_dtype)
    # Wo pre-transposed and pre-reshaped to (H, hd, d_out) so the finalize needs no
    # in-kernel reshape: out[q,o] = sum_{h,d} ctx[h,q,d] * wo3[h,d,o].
    wo3 = wo.T.reshape(num_heads, head_dim, d_out).astype(compute_dtype)
    bo2 = bo.reshape(1, d_out).astype(jnp.float32)
    x2 = x.reshape(B * T, d_in).astype(compute_dtype)

    # --- stage 1: fused QKV projection over (row, column) tiles -------------
    rows = B * T
    ncols = 3 * d_out
    tr = _sublane_tile(rows, 512)
    tn = _lane_tile(ncols, 512)        # bounds resident weight to d_in * tn on v7x
    qkv = pl.pallas_call(
        qkv_proj_kernel,
        out_shape=jax.ShapeDtypeStruct((rows, ncols), compute_dtype),
        grid_spec=pltpu.PrefetchScalarGridSpec(
            num_scalar_prefetch=0,
            grid=(rows // tr, ncols // tn),
            in_specs=[
                pl.BlockSpec((tr, d_in), lambda r, n: (r, 0)),
                pl.BlockSpec((d_in, tn), lambda r, n: (0, n)),
            ],
            out_specs=pl.BlockSpec((tr, tn), lambda r, n: (r, n)),
        ),
        compiler_params=pltpu.CompilerParams(
            dimension_semantics=("parallel", "parallel"),
            vmem_limit_bytes=vmem_limit),
    )(x2, wqkv_t)

    # Free XLA column slices of the fused output.
    q2 = qkv[:, :d_out]
    k2 = qkv[:, d_out:2 * d_out]
    v2 = qkv[:, 2 * d_out:]

    # Head-major layout for the attention kernel (cheap XLA transpose outside Pallas).
    # TODO(synk): on v5e, write stage-1 outputs directly head-major to skip this HBM pass.
    def to_heads(a):
        return a.reshape(B, T, num_heads, head_dim).transpose(0, 2, 1, 3)   # (B, H, T, hd)
    qh, kh, vh = to_heads(q2), to_heads(k2), to_heads(v2)

    # --- stage 2: flash attention + fused output projection -----------------
    tq = _sublane_tile(T, 256)
    tk = tq                       # equal tiles required by the causal DMA-skip clamp
    nq, nk = T // tq, T // tk

    exp_dtype = (jnp.bfloat16
                 if (jnp.dtype(compute_dtype) == jnp.dtype(jnp.bfloat16)
                     and _has_bf16_transcendentals())
                 else jnp.float32)
    flash_kernel = _make_flash_kernel(exp_dtype)

    # K/V index maps clamp the kv block index: tiles strictly above the diagonal reuse
    # the already-resident block -> no new DMA (compute is gated by pl.when).
    kv_index_map = lambda b, qi, ki: (b, 0, jnp.minimum(ki, qi), 0)

    # TODO(synk): nn.Dropout on attention weights is identity in eval mode; not applied.
    # TODO(synk): on v7x with large d_out / num_heads, tile Wo columns / head groups to
    #             bound residency (left resident here; fine at these shapes).
    out = pl.pallas_call(
        flash_kernel,
        out_shape=jax.ShapeDtypeStruct((B, T, d_out), x.dtype),
        grid_spec=pltpu.PrefetchScalarGridSpec(
            num_scalar_prefetch=0,
            grid=(B, nq, nk),
            in_specs=[
                pl.BlockSpec((1, num_heads, tq, head_dim), lambda b, qi, ki: (b, 0, qi, 0)),
                pl.BlockSpec((1, num_heads, tk, head_dim), kv_index_map),
                pl.BlockSpec((1, num_heads, tk, head_dim), kv_index_map),
                pl.BlockSpec((num_heads, head_dim, d_out), lambda b, qi, ki: (0, 0, 0)),
                pl.BlockSpec((1, d_out), lambda b, qi, ki: (0, 0)),
            ],
            out_specs=pl.BlockSpec((1, tq, d_out), lambda b, qi, ki: (b, qi, 0)),
            scratch_shapes=[
                pltpu.VMEM((num_heads, tq, 1), jnp.float32),          # running max  m
                pltpu.VMEM((num_heads, tq, 1), jnp.float32),          # running sum  l
                pltpu.VMEM((num_heads, tq, head_dim), jnp.float32),   # un-normalized ctx
            ],
        ),
        compiler_params=pltpu.CompilerParams(
            dimension_semantics=("parallel", "parallel", "arbitrary"),
            vmem_limit_bytes=vmem_limit),
    )(qh, kh, vh, wo3, bo2)
    return out


# ---------------------------------------------------------------------------
# Pure-JAX reference (mirrors the PyTorch forward, dropout in eval mode)
# ---------------------------------------------------------------------------
def reference_mha(x, wq, wk, wv, wo, bo, *, num_heads):
    B, T, d_in = x.shape
    d_out = wq.shape[0]
    hd = d_out // num_heads
    q = (x @ wq.T).reshape(B, T, num_heads, hd).transpose(0, 2, 1, 3)
    k = (x @ wk.T).reshape(B, T, num_heads, hd).transpose(0, 2, 1, 3)
    v = (x @ wv.T).reshape(B, T, num_heads, hd).transpose(0, 2, 1, 3)
    scores = jnp.einsum("bhqd,bhkd->bhqk", q, k)
    mask = jnp.triu(jnp.ones((T, T), dtype=bool), k=1)
    scores = jnp.where(mask, -jnp.inf, scores)
    attn = jax.nn.softmax(scores / math.sqrt(hd), axis=-1)
    ctx = jnp.einsum("bhqk,bhkd->bhqd", attn, v).transpose(0, 2, 1, 3).reshape(B, T, d_out)
    return ctx @ wo.T + bo


if __name__ == "__main__":
    # Small shapes consistent with the module's forward.
    B, T = 2, 8
    d_in, d_out = 32, 32
    num_heads = 4           # head_dim = 8

    key = jax.random.PRNGKey(0)
    kx, kq, kk, kv, ko, kb = jax.random.split(key, 6)

    x = jax.random.normal(kx, (B, T, d_in), dtype=jnp.float32)
    # Deterministic synthetic parameters (PyTorch Linear weight shape: (d_out, d_in)).
    wq = jax.random.normal(kq, (d_out, d_in), dtype=jnp.float32) * 0.1
    wk = jax.random.normal(kk, (d_out, d_in), dtype=jnp.float32) * 0.1
    wv = jax.random.normal(kv, (d_out, d_in), dtype=jnp.float32) * 0.1
    wo = jax.random.normal(ko, (d_out, d_out), dtype=jnp.float32) * 0.1
    bo = jax.random.normal(kb, (d_out,), dtype=jnp.float32) * 0.1

    ref = reference_mha(x, wq, wk, wv, wo, bo, num_heads=num_heads)

    # Full-f32 compute path (tight tolerance; approx reciprocal is the only deviation).
    out_f32 = multi_head_attention(x, wq, wk, wv, wo, bo, num_heads=num_heads,
                                   compute_dtype=jnp.float32)
    out_f32 = jax.block_until_ready(out_f32)
    assert out_f32.shape == (B, T, d_out)
    assert jnp.allclose(out_f32, ref, atol=1e-2, rtol=1e-2), "f32 kernel mismatch vs reference"

    # Default bf16-MXU-operand path (f32 accumulation; bf16 exp on v6e/v7x; looser tol).
    out_bf16 = multi_head_attention(x, wq, wk, wv, wo, bo, num_heads=num_heads)
    out_bf16 = jax.block_until_ready(out_bf16)
    assert out_bf16.shape == (B, T, d_out)
    assert jnp.allclose(out_bf16, ref, atol=5e-2, rtol=5e-2), "bf16 kernel mismatch vs reference"

    print("KERNEL_OK")
</pallas_src>

<mosaic_0001>
module attributes {stable_mosaic.version = 11 : i64} {
  func.func @qkv_proj_kernel(%arg0: i32, %arg1: i32, %arg2: memref<16x32xf32, #tpu.memory_space<vmem>>, %arg3: memref<32x96xf32, #tpu.memory_space<vmem>>, %arg4: memref<16x96xf32, #tpu.memory_space<vmem>>) attributes {dimension_semantics = [#tpu.dimension_semantics<parallel>, #tpu.dimension_semantics<parallel>], iteration_bounds = array<i64: 1, 1>, scalar_prefetch = 0 : i64, scratch_operands = 0 : i64, tpu.core_type = #tpu.core_type<tc>, window_params = [{transform_indices = @transform_0, window_bounds = array<i64: 16, 32>}, {transform_indices = @transform_1, window_bounds = array<i64: 32, 96>}, {transform_indices = @transform_2, window_bounds = array<i64: 16, 96>}]} {
    %c0 = arith.constant 0 : index
    %c0_0 = arith.constant 0 : index
    %0 = vector.load %arg2[%c0, %c0_0] : memref<16x32xf32, #tpu.memory_space<vmem>>, vector<16x32xf32>
    %c0_1 = arith.constant 0 : index
    %c0_2 = arith.constant 0 : index
    %1 = vector.load %arg3[%c0_1, %c0_2] : memref<32x96xf32, #tpu.memory_space<vmem>>, vector<32x96xf32>
    %cst = arith.constant dense<0.000000e+00> : vector<16x96xf32>
    %2 = tpu.matmul %0, %1, %cst {dimension_numbers = #tpu.dot_dimension_numbers<[1], [0], [0], [1], [0, 0, 1, 1], [], []>} : vector<16x32xf32>, vector<32x96xf32>, vector<16x96xf32> -> vector<16x96xf32>
    %c0_3 = arith.constant 0 : index
    %c0_4 = arith.constant 0 : index
    %3 = vector.load %arg4[%c0_3, %c0_4] : memref<16x96xf32, #tpu.memory_space<vmem>>, vector<16x96xf32>
    tpu.vector_store %arg4[%c0_3, %c0_4], %2 {strides = array<i32>} : memref<16x96xf32, #tpu.memory_space<vmem>>, vector<16x96xf32>,
    return
  }
  func.func @transform_0(%arg0: i32, %arg1: i32) -> (i32, i32) {
    %c0_i32 = arith.constant 0 : i32
    %c0_i32_0 = arith.constant 0 : i32
    return %arg0, %c0_i32 : i32, i32
  }
  func.func @transform_1(%arg0: i32, %arg1: i32) -> (i32, i32) {
    %c0_i32 = arith.constant 0 : i32
    %c0_i32_0 = arith.constant 0 : i32
    return %c0_i32, %arg1 : i32, i32
  }
  func.func @transform_2(%arg0: i32, %arg1: i32) -> (i32, i32) {
    %c0_i32 = arith.constant 0 : i32
    return %arg0, %arg1 : i32, i32
  }
}

</mosaic_0001>

<llo_original>
// kernel: tpu_custom_call.1
$region0: #{tpu_custom_call.1}
  #allocation0 [shape = 'u32[]', space=smem, size = 0x4, offset = 0x4, fixed_abs, tag = 'smem constant byte address 0x4 - core index']
  #allocation1 [shape = 'u32[144,128]{1,0:T(1,128)}', space=vmem, size = 0x12000, scoped, tag = 'internal scratch']
  %s0 = inlined_call_operand.hbm [shape: f32[16,32], index: 0, kind: input, shape index: {}]
  %s1 = inlined_call_operand.hbm [shape: f32[32,96], index: 1, kind: input, shape index: {}]
  %s2 = inlined_call_operand.hbm [shape: f32[16,96], index: 2, kind: output, shape index: {}]
  %s3 = sld [smem:[#allocation0]]
  $region26: #{tpu_custom_call.1} parent=0
    _
  %s5 = ssub.s32 1, %s3
  %s6 = scalar_select 0, %s5, %s3
  $region1: #{tpu_custom_call.1} parent=0
    #allocation2 [shape = 'u8[8192]{0}', space=vmem, size = 0x2000, scoped, tag = 'input window, operand 0, single buffered']
    #allocation3 [shape = 's32[1]{0}', space=sflag, size = 0x4, scoped, tag = 'scoped memory for tpu_custom_call.1']
    #allocation4 [shape = 's32[1]{0}', space=sflag, size = 0x4, scoped, tag = 'scoped memory for tpu_custom_call.1']
    #allocation5 [shape = 'u8[16384]{0}', space=vmem, size = 0x4000, scoped, tag = 'input window, operand 1, single buffered']
    #allocation6 [shape = 's32[1]{0}', space=sflag, size = 0x4, scoped, tag = 'scoped memory for tpu_custom_call.1']
    #allocation7 [shape = 'u8[8192]{0}', space=vmem, size = 0x2000, scoped, tag = 'output window, operand 0, single buffered']
    %7 = vsyncpa [#allocation3], 0
    %8 = vsyncpa [#allocation6], 0
    %9 = vsyncpa [#allocation4], 0
    // Predicated region
    $region2: #{tpu_custom_call.1} parent=1 // pred_check
      _
    $region3: #{tpu_custom_call.1} parent=1 // pred_check_branch
      %11 = sbr.rel (0) target = $region5
    $region4: #{tpu_custom_call.1} parent=1 // pred_region
      %s13 = ssub.s32 256, 256
      %14 = vsyncadd [#allocation3], %s13
      %s15 = sshll.u32 [#allocation2], 4
      %s16 = int_to_ptr.vmem [resolvable:$true] %s15
      %21 = dma.hbm_to_vmem [thread:$0]  %s0, 256, %s16, [#allocation3], 128, 128, 8
    $region5: #{tpu_custom_call.1} parent=1 // pred_fallthru
      _
    // Predicated region
    $region6: #{tpu_custom_call.1} parent=1 // pred_check
      _
    $region7: #{tpu_custom_call.1} parent=1 // pred_check_branch
      %23 = sbr.rel (0) target = $region9
    $region8: #{tpu_custom_call.1} parent=1 // pred_region
      %s25 = ssub.s32 512, 512
      %26 = vsyncadd [#allocation6], %s25
      %s27 = sshll.u32 [#allocation5], 4
      %s28 = int_to_ptr.vmem [resolvable:$true] %s27
      %33 = dma.hbm_to_vmem [thread:$0]  %s1, 512, %s28, [#allocation6], 128, 128, 8
    $region9: #{tpu_custom_call.1} parent=1 // pred_fallthru
      _
    // Predicated region
    $region10: #{tpu_custom_call.1} parent=1 // pred_check
      _
    $region11: #{tpu_custom_call.1} parent=1 // pred_check_branch
      %35 = sbr.rel (0) target = $region13
    $region12: #{tpu_custom_call.1} parent=1 // pred_region
      %36 = dma.done [#allocation3], 256
    $region13: #{tpu_custom_call.1} parent=1 // pred_fallthru
      _
    // Predicated region
    $region14: #{tpu_custom_call.1} parent=1 // pred_check
      _
    $region15: #{tpu_custom_call.1} parent=1 // pred_check_branch
      %38 = sbr.rel (0) target = $region17
    $region16: #{tpu_custom_call.1} parent=1 // pred_region
      %39 = dma.done [#allocation6], 512
    $region17: #{tpu_custom_call.1} parent=1 // pred_fallthru
      _
    %v40 = vld [vmem:[#allocation2] sm:$0xff]
    %v41 = vld [vmem:[#allocation2 + $0x8] sm:$0xff]
    %v42 = vld [vmem:[#allocation5] sm:$0xff]
    %v43 = vld [vmem:[#allocation5 + $0x8] sm:$0xff]
    %v44 = vld [vmem:[#allocation5 + $0x10] sm:$0xff]
    %v45 = vld [vmem:[#allocation5 + $0x18] sm:$0xff]
    %vm46 = vcmask 261120
    %v48 = vsel %vm46, %v40, 0
    %v51 = vsel %vm46, %v41, 0
    %53 = vmatprep.subr.mxu0 0.0
    %54 = vmatpush1.msra.mxu0 %v42
    %55 = vmatprep.subr.mxu0 0.0
    %56 = vmatpush1.msra.mxu0 %v43
    %57 = vmatprep.subr.mxu0 0.0
    %58 = vmatpush1.msra.mxu0 %v44
    %59 = vmatprep.subr.mxu0 0.0
    %60 = vmatpush1.msra.mxu0 %v45
    %61 = vmatprep.subr.mxu0 0.0
    %62 = vmatpush1.msra.mxu0 0.0
    %63 = vmatprep.subr.mxu0 0.0
    %64 = vmatpush1.msra.mxu0 0.0
    %65 = vmatprep.subr.mxu0 0.0
    %66 = vmatpush1.msra.mxu0 0.0
    %67 = vmatprep.subr.mxu0 0.0
    %68 = vmatpush1.msra.mxu0 0.0
    %69 = vmatprep.subr.mxu0 0.0
    %70 = vmatpush1.msra.mxu0 0.0
    %71 = vmatprep.subr.mxu0 0.0
    %72 = vmatpush1.msra.mxu0 0.0
    %73 = vmatprep.subr.mxu0 0.0
    %74 = vmatpush1.msra.mxu0 0.0
    %75 = vmatprep.subr.mxu0 0.0
    %76 = vmatpush1.msra.mxu0 0.0
    %77 = vmatprep.subr.mxu0 0.0
    %78 = vmatpush1.msra.mxu0 0.0
    %79 = vmatprep.subr.mxu0 0.0
    %80 = vmatpush1.msra.mxu0 0.0
    %81 = vmatprep.subr.mxu0 0.0
    %82 = vmatpush1.msra.mxu0 0.0
    %83 = vmatprep.subr.mxu0 0.0
    %84 = vmatpush1.msra.mxu0 0.0
    %85 = vmatprep.subr.mxu0 0.0
    %86 = vmatpush1.msra.mxu0 0.0
    %87 = vmatprep.subr.mxu0 0.0
    %88 = vmatpush1.msra.mxu0 0.0
    %89 = vmatprep.subr.mxu0 0.0
    %90 = vmatpush1.msra.mxu0 0.0
    %91 = vmatprep.subr.mxu0 0.0
    %92 = vmatpush1.msra.mxu0 0.0
    %93 = vmatprep.subr.mxu0 0.0
    %94 = vmatpush1.msra.mxu0 0.0
    %95 = vmatprep.subr.mxu0 0.0
    %96 = vmatpush1.msra.mxu0 0.0
    %97 = vmatprep.subr.mxu0 0.0
    %98 = vmatpush1.msra.mxu0 0.0
    %99 = vmatprep.subr.mxu0 0.0
    %100 = vmatpush1.msra.mxu0 0.0
    %101 = vmatprep.subr.mxu0 0.0
    %102 = vmatpush1.msra.mxu0 0.0
    %103 = vmatprep.subr.mxu0 0.0
    %104 = vmatpush1.msra.mxu0 0.0
    %105 = vmatprep.subr.mxu0 0.0
    %106 = vmatpush1.msra.mxu0 0.0
    %107 = vmatprep.subr.mxu0 0.0
    %108 = vmatpush1.msra.mxu0 0.0
    %109 = vmatprep.subr.mxu0 0.0
    %110 = vmatpush1.msra.mxu0 0.0
    %111 = vmatprep.subr.mxu0 0.0
    %112 = vmatpush1.msra.mxu0 0.0
    %113 = vmatprep.subr.mxu0 0.0
    %114 = vmatpush1.msra.mxu0 0.0
    %115 = vmatprep.subr.mxu0 0.0
    %116 = vmatpush1.msra.mxu0 0.0
    %117 = vmatprep.mubr.f32.mxu0 0.0
    %118 = vmatmul.mubr.f32.gmra.mrb[0].mxu0 %v48
    %v119 = vpop.f32.mrb[0].mxu0
    %v120 = vadd.f32 0.0, %v119
    %v121 = vpop.f32.mrb[0].mxu0
    %122 = vmatprep.mubr.f32.mxu0 0.0
    %123 = vmatmul.mubr.f32.gmra.mrb[0].mxu0 %v51
    %v124 = vpop.f32.mrb[0].mxu0
    %v125 = vadd.f32 0.0, %v124
    %v126 = vpop.f32.mrb[0].mxu0
    %127 = vdwg.mxu0
    %vm128 = vcmask 785408
    %129 = vst.msk [vmem:[#allocation7] sm:$0xff] %vm128, %v120
    %130 = vst.msk [vmem:[#allocation7 + $0x8] sm:$0xff] %vm128, %v125
    // Predicated region
    $region18: #{tpu_custom_call.1} parent=1 // pred_check
      _
    $region19: #{tpu_custom_call.1} parent=1 // pred_check_branch
      %132 = sbr.rel (0) target = $region21
    $region20: #{tpu_custom_call.1} parent=1 // pred_region
      %s134 = ssub.s32 256, 256
      %135 = vsyncadd [#allocation4], %s134
      %s136 = sshll.u32 [#allocation7], 4
      %s137 = int_to_ptr.vmem [resolvable:$true] %s136
      %142 = dma.vmem_to_hbm [thread:$0]  %s137, 256, %s2, [#allocation4], 128, 128, 8
    $region21: #{tpu_custom_call.1} parent=1 // pred_fallthru
      _
    // Predicated region
    $region22: #{tpu_custom_call.1} parent=1 // pred_check
      _
    $region23: #{tpu_custom_call.1} parent=1 // pred_check_branch
      %144 = sbr.rel (0) target = $region25
    $region24: #{tpu_custom_call.1} parent=1 // pred_region
      %145 = dma.done [#allocation4], 256
    $region25: #{tpu_custom_call.1} parent=1 // pred_fallthru
      _
    %146 = vsyncpa [#allocation3], 1
    %147 = vsyncpa [#allocation6], 1
    %148 = vsyncpa [#allocation4], 1

</llo_original>
